<compile_context>
chip_gen: v5e
topology: v5e:2x2
jax: 0.10.0
libtpu: 0.0.40
codegen_flags: <defaults>
</compile_context>

<pallas_src>
import numpy as np
import jax
import jax.numpy as jnp
from jax.experimental import pallas as pl
from jax.experimental.pallas import tpu as pltpu


# --------------------------------------------------------------------------- #
# Tile / VMEM helpers
# --------------------------------------------------------------------------- #
def _vmem_limit_bytes():
    """Scoped-VMEM budget: ~96 MiB on v5e/v6e (128 MiB phys), 48 MiB on v7x."""
    try:
        cap = pltpu.get_tpu_info().vmem_capacity_bytes
        return int(min(cap * 3 // 4, 100 * 1024 * 1024))
    except Exception:
        return 48 * 1024 * 1024  # safe on v5e / v6e / v7x


def _pick_row_tile(n):
    # Prefer >= 2 row tiles so the 'parallel' axis can shard across v7x's 2 TCs.
    for t in (512, 256, 128):
        if n % t == 0 and n // t >= 2:
            return t
    for t in (512, 256, 128):
        if n % t == 0:
            return t
    return n


def _pick_k_tile(n, tm, budget):
    # Large K tiles amortize the ~0.35us per-grid-step overhead; bound by VMEM.
    for t in (4096, 2048, 1024, 512, 256, 128):
        if n % t == 0 and 3 * tm * t <= budget // 4:  # int8 A tiles, buffered
            return t
    return n


# --------------------------------------------------------------------------- #
# One-time graph preprocessing (host side): binary (A+I) int8, D^{-1/2},
# and the block-skip schedule for the chosen (tm, tk) tiling.
# --------------------------------------------------------------------------- #
def preprocess_graph(edge_index, num_nodes, tm=None, tk=None):
    budget = _vmem_limit_bytes()
    tm = _pick_row_tile(num_nodes) if tm is None else tm
    tk = _pick_k_tile(num_nodes, tm, budget) if tk is None else tk
    assert num_nodes % tm == 0 and num_nodes % tk == 0  # TODO(synk): pad ragged N

    src = np.asarray(edge_index[0])
    dst = np.asarray(edge_index[1])
    adj = np.zeros((num_nodes, num_nodes), np.float32)
    adj[dst, src] = 1.0
    adj[src, dst] = 1.0                                  # undirected
    adj[np.arange(num_nodes), np.arange(num_nodes)] = 1.0  # self loops
    deg = adj.sum(axis=1)
    d_inv_sqrt = (1.0 / np.sqrt(deg)).astype(np.float32).reshape(num_nodes, 1)

    mt, kt = num_nodes // tm, num_nodes // tk
    nz = adj.reshape(mt, tm, kt, tk).sum(axis=(1, 3)) > 0   # (mt, kt) nonzero blocks
    counts = nz.sum(axis=1).astype(np.int32)                # (mt,)
    kmax = max(int(counts.max()), 1)
    blk = np.zeros((mt, kmax), np.int32)
    for i in range(mt):
        cols = np.nonzero(nz[i])[0]
        blk[i, :len(cols)] = cols
        if len(cols) < kmax:                                # pad with a valid block
            blk[i, len(cols):] = cols[-1] if len(cols) else 0

    return dict(
        a01=jnp.asarray(adj.astype(np.int8)),        # exact binary (A+I), int8 in HBM
        d_inv_sqrt=jnp.asarray(d_inv_sqrt),          # (N, 1) f32
        blk=jnp.asarray(blk.reshape(-1)),            # flattened -> SMEM friendly
        cnt=jnp.asarray(counts),
        kmax=kmax, tm=tm, tk=tk,
    )


# --------------------------------------------------------------------------- #
# One-time parameter preparation (fused, lane-padded output head weights).
# --------------------------------------------------------------------------- #
def prepare_params(params):
    H = params["w1"].shape[1]
    D3 = params["wl3"].shape[1]
    NH = 1 + D3
    P = 128
    assert NH + H <= P

    # Packed output slab layout: [0]=Degree_layer, [1:NH]=linear3,
    # [NH:NH+H]=log_softmax(xo) via identity columns minus (m + lse).
    wout = jnp.zeros((H, P), jnp.float32)
    wout = wout.at[:, 0:1].set(params["wl2"])
    wout = wout.at[:, 1:NH].set(params["wl3"])
    wout = wout.at[:, NH:NH + H].set(jnp.eye(H, dtype=jnp.float32))
    bout = jnp.zeros((1, P), jnp.float32)
    bout = bout.at[:, 0:1].set(params["bl2"])
    bout = bout.at[:, 1:NH].set(params["bl3"])
    r1_mask = jnp.zeros((1, P), jnp.float32).at[:, NH:NH + H].set(-1.0)

    return dict(
        w1=params["w1"], b1=params["b1"],
        w2_bf=params["w2"].astype(jnp.bfloat16), b2=params["b2"],
        wd=params["wd"], bd=params["bd"],
        wout=wout, bout=bout, r1_mask=r1_mask,
        hid=H, num_heads=NH,
    )


# --------------------------------------------------------------------------- #
# Forward
# --------------------------------------------------------------------------- #
def gnn_gcn_forward(graph, x, prep):
    N = x.shape[0]
    H, NH, P = prep["hid"], prep["num_heads"], 128
    tm, tk, kmax = graph["tm"], graph["tk"], graph["kmax"]
    mt = N // tm
    a01, d = graph["a01"], graph["d_inv_sqrt"]
    blk, cnt = graph["blk"], graph["cnt"]

    # Tiny projections hoisted out of the streaming kernels (negligible HBM):
    xw1s = (d * jnp.dot(x, prep["w1"], precision=jax.lax.Precision.HIGHEST)
            ).astype(jnp.bfloat16)                                   # (N, H) bf16
    res = (jnp.dot(x, prep["wd"], precision=jax.lax.Precision.HIGHEST)
           + prep["bd"] + prep["b2"])                                # (N, H) f32

    cparams = pltpu.CompilerParams(
        dimension_semantics=("parallel", "arbitrary"),
        vmem_limit_bytes=_vmem_limit_bytes(),
    )

    def a_index_map(i, k, blk_ref, cnt_ref):          # block-skip schedule
        return (i, blk_ref[i * kmax + k])

    def row_map(i, k, blk_ref, cnt_ref):
        return (i, 0)

    def const_map(i, k, blk_ref, cnt_ref):
        return (0, 0)

    # ---- Pass 1: ys = d * (relu(d * (A+I) @ xw1s + b1) @ W2) ---------------
    def conv1_kernel(blk_ref, cnt_ref, a_ref, rhs_ref, d_ref, b1_ref, w2_ref,
                     y_ref, acc_ref):
        i = pl.program_id(0)
        k = pl.program_id(1)

        @pl.when(k == 0)
        def _():
            acc_ref[...] = jnp.zeros_like(acc_ref)

        @pl.when(k < cnt_ref[i])                      # skip padded schedule slots
        def _():
            start = pl.multiple_of(blk_ref[i * kmax + k] * tk, tk)
            # two-step cast keeps to universally supported converts; 0/1 is exact
            a_bf = a_ref[...].astype(jnp.float32).astype(jnp.bfloat16)
            acc_ref[...] += jnp.dot(a_bf, rhs_ref[pl.ds(start, tk), :],
                                    preferred_element_type=jnp.float32)

        @pl.when(k == pl.num_programs(1) - 1)
        def _():
            dsc = d_ref[...]
            h = jnp.maximum(dsc * acc_ref[...] + b1_ref[...], 0.0)
            # TODO(synk): dropout(p=0.25) is identity with training=False.
            y_ref[...] = (dsc * jnp.dot(h.astype(jnp.bfloat16), w2_ref[...],
                                        preferred_element_type=jnp.float32)
                          ).astype(y_ref.dtype)

    ys = pl.pallas_call(
        conv1_kernel,
        out_shape=jax.ShapeDtypeStruct((N, H), jnp.bfloat16),
        grid_spec=pltpu.PrefetchScalarGridSpec(
            num_scalar_prefetch=2,
            grid=(mt, kmax),
            in_specs=[
                pl.BlockSpec((tm, tk), a_index_map),   # int8 (A+I) tile
                pl.BlockSpec((N, H), const_map),       # resident xw1s (bf16)
                pl.BlockSpec((tm, 1), row_map),        # d^{-1/2} rows
                pl.BlockSpec((1, H), const_map),       # b1
                pl.BlockSpec((H, H), const_map),       # W2 (bf16)
            ],
            out_specs=pl.BlockSpec((tm, H), row_map),
            scratch_shapes=[pltpu.VMEM((tm, H), jnp.float32)],
        ),
        compiler_params=cparams,
    )(blk, cnt, a01, xw1s, d, prep["b1"], prep["w2_bf"])

    # ---- Pass 2: xo = d * (A+I) @ ys + res; packed heads + log_softmax -----
    def conv2_kernel(blk_ref, cnt_ref, a_ref, rhs_ref, d_ref, res_ref,
                     wout_ref, bout_ref, msk_ref, out_ref, acc_ref):
        i = pl.program_id(0)
        k = pl.program_id(1)

        @pl.when(k == 0)
        def _():
            acc_ref[...] = jnp.zeros_like(acc_ref)

        @pl.when(k < cnt_ref[i])
        def _():
            start = pl.multiple_of(blk_ref[i * kmax + k] * tk, tk)
            a_bf = a_ref[...].astype(jnp.float32).astype(jnp.bfloat16)
            acc_ref[...] += jnp.dot(a_bf, rhs_ref[pl.ds(start, tk), :],
                                    preferred_element_type=jnp.float32)

        @pl.when(k == pl.num_programs(1) - 1)
        def _():
            xo = d_ref[...] * acc_ref[...] + res_ref[...]
            m = jnp.max(xo, axis=-1, keepdims=True)
            lse = jnp.log(jnp.sum(jnp.exp(xo - m), axis=-1, keepdims=True))
            # Single lane-dense (tm, 128) store: heads + log_softmax packed.
            out_ref[...] = (jnp.dot(xo, wout_ref[...],
                                    preferred_element_type=jnp.float32)
                            + bout_ref[...] + (m + lse) * msk_ref[...])

    packed = pl.pallas_call(
        conv2_kernel,
        out_shape=jax.ShapeDtypeStruct((N, P), jnp.float32),
        grid_spec=pltpu.PrefetchScalarGridSpec(
            num_scalar_prefetch=2,
            grid=(mt, kmax),
            in_specs=[
                pl.BlockSpec((tm, tk), a_index_map),   # int8 (A+I) tile
                pl.BlockSpec((N, H), const_map),       # resident ys (bf16)
                pl.BlockSpec((tm, 1), row_map),        # d^{-1/2} rows
                pl.BlockSpec((tm, H), row_map),        # residual (+ b2) rows
                pl.BlockSpec((H, P), const_map),       # fused head / identity weights
                pl.BlockSpec((1, P), const_map),       # fused head bias
                pl.BlockSpec((1, P), const_map),       # -(m+lse) column mask
            ],
            out_specs=pl.BlockSpec((tm, P), row_map),
            scratch_shapes=[pltpu.VMEM((tm, H), jnp.float32)],
        ),
        compiler_params=cparams,
    )(blk, cnt, a01, ys, d, res, prep["wout"], prep["bout"], prep["r1_mask"])

    # forward() returns [result1, result2.squeeze(-1), result3.squeeze(-1)]
    r1 = packed[:, NH:NH + H]     # log_softmax(x, -1)
    r2 = packed[:, 0]             # Degree_layer output, squeezed -> [N]
    r3 = packed[:, 1:NH]          # linear3 output -> [N, D3]
    return [r1, r2, r3]


# --------------------------------------------------------------------------- #
# Demo / self-test
# --------------------------------------------------------------------------- #
if __name__ == "__main__":
    # Ring + skip-2 chords: at tk=128 each row tile only touches 3 of the 4
    # column blocks, so the block-skip schedule genuinely prunes grid steps.
    N, F, H, D3 = 512, 8, 32, 4
    TM, TK = 128, 128

    key = jax.random.PRNGKey(0)
    keys = jax.random.split(key, 8)
    x = jax.random.normal(keys[0], (N, F), dtype=jnp.float32)

    idx = jnp.arange(N, dtype=jnp.int32)
    edge_index = (jnp.concatenate([idx, idx]),
                  jnp.concatenate([(idx + 1) % N, (idx + 2) % N]))

    def lin_init(k, fan_in, fan_out):
        kw, kb = jax.random.split(k)
        scale = 1.0 / jnp.sqrt(jnp.float32(fan_in))
        w = jax.random.uniform(kw, (fan_in, fan_out), jnp.float32, -scale, scale)
        b = jax.random.uniform(kb, (1, fan_out), jnp.float32, -scale, scale)
        return w, b

    w1, b1 = lin_init(keys[1], F, H)      # conv1 (GCNConv)
    w2, b2 = lin_init(keys[2], H, H)      # conv2 (GCNConv)
    wd, bd = lin_init(keys[3], F, H)      # down_sample
    wl2, bl2 = lin_init(keys[4], H, 1)    # Degree_layer ~ Linear(H, 1)
    wl3, bl3 = lin_init(keys[5], H, D3)   # linear3

    params = dict(w1=w1, b1=b1, w2=w2, b2=b2, wd=wd, bd=bd,
                  wl2=wl2, bl2=bl2, wl3=wl3, bl3=bl3)

    graph = preprocess_graph(edge_index, N, TM, TK)   # one-time: int8 A+I, schedule
    prep = prepare_params(params)                     # one-time: fused heads, bf16 W2

    out = gnn_gcn_forward(graph, x, prep)
    out = jax.block_until_ready(out)

    # Pure-JAX reference mirroring the kernel's exact-binary-A / bf16 / f32 math.
    HI = jax.lax.Precision.HIGHEST
    a01f = graph["a01"].astype(jnp.float32)
    d = graph["d_inv_sqrt"]
    xw1s_ref = (d * jnp.dot(x, w1, precision=HI)).astype(jnp.bfloat16)
    h_ref = jnp.maximum(
        d * jnp.dot(a01f.astype(jnp.bfloat16), xw1s_ref,
                    preferred_element_type=jnp.float32) + b1, 0.0)
    ys_ref = (d * jnp.dot(h_ref.astype(jnp.bfloat16), w2.astype(jnp.bfloat16),
                          preferred_element_type=jnp.float32)).astype(jnp.bfloat16)
    xo_ref = (d * jnp.dot(a01f.astype(jnp.bfloat16), ys_ref,
                          preferred_element_type=jnp.float32)
              + b2 + jnp.dot(x, wd, precision=HI) + bd)
    r1_ref = jax.nn.log_softmax(xo_ref, axis=-1)
    r2_ref = jnp.squeeze(jnp.dot(xo_ref, wl2, precision=HI) + bl2, -1)
    r3_ref = jnp.dot(xo_ref, wl3, precision=HI) + bl3

    assert out[0].shape == (N, H) and out[1].shape == (N,) and out[2].shape == (N, D3)
    assert jnp.allclose(out[0], r1_ref, atol=2e-2), "result1 mismatch"
    assert jnp.allclose(out[1], r2_ref, atol=2e-2), "result2 mismatch"
    assert jnp.allclose(out[2], r3_ref, atol=2e-2), "result3 mismatch"

    print("KERNEL_OK")
</pallas_src>

<mosaic_0001>
module attributes {stable_mosaic.version = 11 : i64} {
  func.func @conv1_kernel(%arg0: i32, %arg1: i32, %arg2: memref<12xi32, #tpu.memory_space<smem>>, %arg3: memref<4xi32, #tpu.memory_space<smem>>, %arg4: memref<128x128xi8, #tpu.memory_space<vmem>>, %arg5: memref<512x32xbf16, #tpu.memory_space<vmem>>, %arg6: memref<128x1xf32, #tpu.memory_space<vmem>>, %arg7: memref<1x32xf32, #tpu.memory_space<vmem>>, %arg8: memref<32x32xbf16, #tpu.memory_space<vmem>>, %arg9: memref<128x32xbf16, #tpu.memory_space<vmem>>, %arg10: memref<128x32xf32, #tpu.memory_space<vmem>>) attributes {dimension_semantics = [#tpu.dimension_semantics<parallel>, #tpu.dimension_semantics<arbitrary>], iteration_bounds = array<i64: 4, 3>, scalar_prefetch = 2 : i64, scratch_operands = 1 : i64, tpu.core_type = #tpu.core_type<tc>, window_params = [{transform_indices = @transform_0, window_bounds = array<i64: 128, 128>}, {pipeline_mode = #tpu.pipeline_mode<synchronous>, transform_indices = @transform_1, window_bounds = array<i64: 512, 32>}, {transform_indices = @transform_2, window_bounds = array<i64: 128, 1>}, {pipeline_mode = #tpu.pipeline_mode<synchronous>, transform_indices = @transform_3, window_bounds = array<i64: 1, 32>}, {pipeline_mode = #tpu.pipeline_mode<synchronous>, transform_indices = @transform_4, window_bounds = array<i64: 32, 32>}, {transform_indices = @transform_5, window_bounds = array<i64: 128, 32>}]} {
    %c0_i32 = arith.constant 0 : i32
    %0 = arith.cmpi eq, %arg1, %c0_i32 : i32
    %1 = arith.extui %0 : i1 to i32
    %c0_i32_0 = arith.constant 0 : i32
    %2 = arith.cmpi ne, %1, %c0_i32_0 : i32
    scf.if %2 {
      %cst = arith.constant 0.000000e+00 : f32
      %11 = vector.broadcast %cst : f32 to vector<128x32xf32>
      %c0 = arith.constant 0 : index
      %c0_3 = arith.constant 0 : index
      %12 = vector.load %arg10[%c0, %c0_3] : memref<128x32xf32, #tpu.memory_space<vmem>>, vector<128x32xf32>
      tpu.vector_store %arg10[%c0, %c0_3], %11 {strides = array<i32>} : memref<128x32xf32, #tpu.memory_space<vmem>>, vector<128x32xf32>,
    } else {
    }
    %3 = arith.index_cast %arg0 : i32 to index
    %4 = memref.load %arg3[%3] : memref<4xi32, #tpu.memory_space<smem>>
    %5 = arith.cmpi slt, %arg1, %4 : i32
    %6 = arith.extui %5 : i1 to i32
    %c0_i32_1 = arith.constant 0 : i32
    %7 = arith.cmpi ne, %6, %c0_i32_1 : i32
    scf.if %7 {
      %c3_i32 = arith.constant 3 : i32
      %11 = arith.muli %arg0, %c3_i32 : i32
      %12 = arith.addi %11, %arg1 : i32
      %13 = arith.index_cast %12 : i32 to index
      %14 = memref.load %arg2[%13] : memref<12xi32, #tpu.memory_space<smem>>
      %c128_i32 = arith.constant 128 : i32
      %15 = arith.muli %14, %c128_i32 : i32
      %16 = tpu.assume_multiple %15, 128 : i32
      %c0 = arith.constant 0 : index
      %c0_3 = arith.constant 0 : index
      %17 = vector.load %arg4[%c0, %c0_3] : memref<128x128xi8, #tpu.memory_space<vmem>>, vector<128x128xi8>
      %18 = arith.sitofp %17 : vector<128x128xi8> to vector<128x128xf32>
      %19 = arith.truncf %18 : vector<128x128xf32> to vector<128x128xbf16>
      %c0_4 = arith.constant 0 : index
      %c0_5 = arith.constant 0 : index
      %20 = vector.load %arg10[%c0_4, %c0_5] : memref<128x32xf32, #tpu.memory_space<vmem>>, vector<128x32xf32>
      %21 = arith.index_cast %16 : i32 to index
      %c0_6 = arith.constant 0 : index
      %22 = vector.load %arg5[%21, %c0_6] : memref<512x32xbf16, #tpu.memory_space<vmem>>, vector<128x32xbf16>
      %cst = arith.constant dense<0.000000e+00> : vector<128x32xf32>
      %23 = tpu.matmul %19, %22, %cst {dimension_numbers = #tpu.dot_dimension_numbers<[1], [0], [0], [1], [0, 0, 1, 1], [], []>} : vector<128x128xbf16>, vector<128x32xbf16>, vector<128x32xf32> -> vector<128x32xf32>
      %24 = arith.addf %20, %23 : vector<128x32xf32>
      %c0_7 = arith.constant 0 : index
      %c0_8 = arith.constant 0 : index
      %25 = vector.load %arg10[%c0_7, %c0_8] : memref<128x32xf32, #tpu.memory_space<vmem>>, vector<128x32xf32>
      tpu.vector_store %arg10[%c0_7, %c0_8], %24 {strides = array<i32>} : memref<128x32xf32, #tpu.memory_space<vmem>>, vector<128x32xf32>,
    } else {
    }
    %c2_i32 = arith.constant 2 : i32
    %8 = arith.cmpi eq, %arg1, %c2_i32 : i32
    %9 = arith.extui %8 : i1 to i32
    %c0_i32_2 = arith.constant 0 : i32
    %10 = arith.cmpi ne, %9, %c0_i32_2 : i32
    scf.if %10 {
      %c0 = arith.constant 0 : index
      %c0_3 = arith.constant 0 : index
      %11 = vector.load %arg6[%c0, %c0_3] : memref<128x1xf32, #tpu.memory_space<vmem>>, vector<128x1xf32>
      %c0_4 = arith.constant 0 : index
      %c0_5 = arith.constant 0 : index
      %12 = vector.load %arg10[%c0_4, %c0_5] : memref<128x32xf32, #tpu.memory_space<vmem>>, vector<128x32xf32>
      %13 = vector.broadcast %11 : vector<128x1xf32> to vector<128x32xf32>
      %14 = arith.mulf %13, %12 : vector<128x32xf32>
      %c0_6 = arith.constant 0 : index
      %c0_7 = arith.constant 0 : index
      %15 = vector.load %arg7[%c0_6, %c0_7] : memref<1x32xf32, #tpu.memory_space<vmem>>, vector<1x32xf32>
      %16 = vector.broadcast %15 : vector<1x32xf32> to vector<128x32xf32>
      %17 = arith.addf %14, %16 : vector<128x32xf32>
      %cst = arith.constant 0.000000e+00 : f32
      %18 = vector.broadcast %cst : f32 to vector<128x32xf32>
      %19 = arith.maximumf %17, %18 : vector<128x32xf32>
      %20 = arith.truncf %19 : vector<128x32xf32> to vector<128x32xbf16>
      %c0_8 = arith.constant 0 : index
      %c0_9 = arith.constant 0 : index
      %21 = vector.load %arg8[%c0_8, %c0_9] : memref<32x32xbf16, #tpu.memory_space<vmem>>, vector<32x32xbf16>
      %cst_10 = arith.constant dense<0.000000e+00> : vector<128x32xf32>
      %22 = tpu.matmul %20, %21, %cst_10 {dimension_numbers = #tpu.dot_dimension_numbers<[1], [0], [0], [1], [0, 0, 1, 1], [], []>} : vector<128x32xbf16>, vector<32x32xbf16>, vector<128x32xf32> -> vector<128x32xf32>
      %23 = vector.broadcast %11 : vector<128x1xf32> to vector<128x32xf32>
      %24 = arith.mulf %23, %22 : vector<128x32xf32>
      %25 = arith.truncf %24 : vector<128x32xf32> to vector<128x32xbf16>
      %c0_11 = arith.constant 0 : index
      %c0_12 = arith.constant 0 : index
      %26 = vector.load %arg9[%c0_11, %c0_12] : memref<128x32xbf16, #tpu.memory_space<vmem>>, vector<128x32xbf16>
      tpu.vector_store %arg9[%c0_11, %c0_12], %25 {strides = array<i32>} : memref<128x32xbf16, #tpu.memory_space<vmem>>, vector<128x32xbf16>,
    } else {
    }
    return
  }
  func.func @transform_0(%arg0: i32, %arg1: i32, %arg2: memref<12xi32, #tpu.memory_space<smem>>, %arg3: memref<4xi32, #tpu.memory_space<smem>>) -> (i32, i32) {
    %c3_i32 = arith.constant 3 : i32
    %0 = arith.muli %arg0, %c3_i32 : i32
    %1 = arith.addi %0, %arg1 : i32
    %2 = arith.index_cast %1 : i32 to index
    %3 = memref.load %arg2[%2] : memref<12xi32, #tpu.memory_space<smem>>
    %c0_i32 = arith.constant 0 : i32
    return %arg0, %3 : i32, i32
  }
  func.func @transform_1(%arg0: i32, %arg1: i32, %arg2: memref<12xi32, #tpu.memory_space<smem>>, %arg3: memref<4xi32, #tpu.memory_space<smem>>) -> (i32, i32) {
    %c0_i32 = arith.constant 0 : i32
    %c0_i32_0 = arith.constant 0 : i32
    %c0_i32_1 = arith.constant 0 : i32
    return %c0_i32, %c0_i32_0 : i32, i32
  }
  func.func @transform_2(%arg0: i32, %arg1: i32, %arg2: memref<12xi32, #tpu.memory_space<smem>>, %arg3: memref<4xi32, #tpu.memory_space<smem>>) -> (i32, i32) {
    %c0_i32 = arith.constant 0 : i32
    %c0_i32_0 = arith.constant 0 : i32
    return %arg0, %c0_i32 : i32, i32
  }
  func.func @transform_3(%arg0: i32, %arg1: i32, %arg2: memref<12xi32, #tpu.memory_space<smem>>, %arg3: memref<4xi32, #tpu.memory_space<smem>>) -> (i32, i32) {
    %c0_i32 = arith.constant 0 : i32
    %c0_i32_0 = arith.constant 0 : i32
    %c0_i32_1 = arith.constant 0 : i32
    return %c0_i32, %c0_i32_0 : i32, i32
  }
  func.func @transform_4(%arg0: i32, %arg1: i32, %arg2: memref<12xi32, #tpu.memory_space<smem>>, %arg3: memref<4xi32, #tpu.memory_space<smem>>) -> (i32, i32) {
    %c0_i32 = arith.constant 0 : i32
    %c0_i32_0 = arith.constant 0 : i32
    %c0_i32_1 = arith.constant 0 : i32
    return %c0_i32, %c0_i32_0 : i32, i32
  }
  func.func @transform_5(%arg0: i32, %arg1: i32, %arg2: memref<12xi32, #tpu.memory_space<smem>>, %arg3: memref<4xi32, #tpu.memory_space<smem>>) -> (i32, i32) {
    %c0_i32 = arith.constant 0 : i32
    %c0_i32_0 = arith.constant 0 : i32
    return %arg0, %c0_i32 : i32, i32
  }
}

</mosaic_0001>

<llo_original>
// kernel: tpu_custom_call.1
$region0: #{tpu_custom_call.1}
  #allocation0 [shape = 'u32[]', space=smem, size = 0x4, offset = 0x4, fixed_abs, tag = 'smem constant byte address 0x4 - core index']
  #allocation1 [shape = 'u32[72,128]{1,0:T(1,128)}', space=vmem, size = 0x9000, scoped, tag = 'internal scratch']
  #allocation2 [shape = 'f32[128,32]{1,0:T(8,128)}', space=vmem, size = 0x10000, scoped, tag = 'scratch operand']
  #allocation3 [shape = 's32[1]{0}', space=sflag, size = 0x4, scoped, tag = 'scoped memory for tpu_custom_call.1']
  #allocation4 [shape = 'u8[512]{0}', space=smem, size = 0x200, scoped, tag = 'prefetched SMEM operand 0']
  #allocation5 [shape = 'u8[512]{0}', space=smem, size = 0x200, scoped, tag = 'prefetched SMEM operand 1']
  %s0 = inlined_call_operand.vmem [shape: s32[12], index: 0, kind: input, shape index: {}]
  %s1 = inlined_call_operand.vmem [shape: s32[4], index: 1, kind: input, shape index: {}]
  %s2 = inlined_call_operand.vmem [shape: s8[512,512], index: 2, kind: input, shape index: {}]
  %s3 = inlined_call_operand.vmem [shape: bf16[512,32], index: 3, kind: input, shape index: {}]
  %s4 = inlined_call_operand.vmem [shape: f32[512,1], index: 4, kind: input, shape index: {}]
  %s5 = inlined_call_operand.vmem [shape: f32[1,32], index: 5, kind: input, shape index: {}]
  %s6 = inlined_call_operand.vmem [shape: bf16[32,32], index: 6, kind: input, shape index: {}]
  %s7 = inlined_call_operand.vmem [shape: bf16[512,32], index: 7, kind: output, shape index: {}]
  %s8 = sld [smem:[#allocation0]]
  $region103: #{tpu_custom_call.1} parent=0
    _
  %s10 = ssub.s32 1, %s8
  %s11 = scalar_select 0, %s10, %s8
  %s13 = sshll.u32 %s0, 4
  %s14 = int_to_ptr.vmem [resolvable:$true] %s13
  %16 = dma.vmem_to_smem %s14, 16, [#allocation4], [#allocation3]
  %s18 = sshll.u32 %s1, 4
  %s19 = int_to_ptr.vmem [resolvable:$true] %s18
  %21 = dma.vmem_to_smem %s19, 16, [#allocation5], [#allocation3]
  %23 = dma.done [#allocation3], 32
  %24 = sfence
  $region1: #{tpu_custom_call.1} parent=0
    #allocation6 [shape = 'u8[32768]{0}', space=vmem, size = 0x8000, scoped, tag = 'input window, operand 2']
    loop: start=0, step=1, limit=14
    $region2: #{tpu_custom_call.1} parent=1 // loop_pre_header
      _
    $region3: #{tpu_custom_call.1} parent=1 // loop_header
      %s26 = sphi 0, %s30
      %p27 = scmp.ge.s32.totalorder %s26, 14
      %s33 = sphi 0, %s45
      %s34 = sphi 0, %s41
      %s35 = sphi 0, %s33
      %s36 = sphi 0, %s34
      %s37 = sphi 0, %s35
      %s38 = sphi 0, %s36
      %s56 = sphi 0, %s58
      %s59 = sphi 0, %s56
      %s60 = sphi 0, %s59
      %s76 = sphi 0, %s60
      %s80 = sphi 0, %s80
      %s82 = sphi 0, %s80
      %s83 = sphi 0, %s82
      %s97 = sphi 0, %s83
      %s103 = sphi 0, %s105
      %s106 = sphi 0, %s103
      %s107 = sphi 0, %s106
      %s123 = sphi 0, %s107
      %s127 = sphi 0, %s127
      %s129 = sphi 0, %s127
      %s130 = sphi 0, %s129
      %s144 = sphi 0, %s130
      %s148 = sphi 0, %s148
      %s150 = sphi 0, %s148
      %s151 = sphi 0, %s150
      %s165 = sphi 0, %s151
      %s171 = sphi 0, %s173
      %s174 = sphi 0, %s171
      %s175 = sphi 0, %s174
      %s191 = sphi 0, %s175
    $region4: #{tpu_custom_call.1} parent=1 // loop_header_branch
      %29 = sbr.rel (%p27) target = $region8
    $region5: #{tpu_custom_call.1} parent=1 // loop_body
      %s31 = ssub.s32 %s26, 1
      %s32 = ssub.s32 %s26, 2
      %s39 = sadd.s32 1, %s34
      %p40 = scmp.ge.s32.totalorder %s39, 3
      %s41 = scalar_select %p40, 0, %s39
      %s42 = sadd.s32 1, %s33
      %s43 = scalar_select %p40, %s42, %s33
      %p44 = scmp.ge.s32.totalorder %s43, 4
      %s45 = scalar_select %p44, 0, %s43
      %s46 = smul.u32 %s33, 3
      %s47 = sadd.s32 %s46, %s34
      %s48 = sld [smem:[#allocation4 + %s47]]
      %s49 = smul.u32 %s45, 3
      %s50 = sadd.s32 %s49, %s41
      %s51 = sld [smem:[#allocation4 + %s50]]
      %s52 = ssub.s32 %s33, %s45
      %s53 = ssub.s32 %s48, %s51
      %s54 = sor.u32 %s52, %s53
      %p55 = scmp.eq.s32.totalorder %s54, 0
      %s57 = sadd.s32 %s56, 1
      %s58 = scalar_select %p55, %s56, %s57
      %p61 = pneg %p55
      %p62 = scmp.eq.s32.totalorder %s26, 11
      %p63 = por %p61, %p62
      %p64 = scmp.ne.s32.totalorder %s56, %s59
      %p65 = scmp.eq.s32.totalorder %s26, 0
      %p66 = por %p64, %p65
      %p67 = scmp.ne.s32.totalorder %s56, %s59
      %p68 = scmp.eq.s32.totalorder %s31, 11
      %p69 = por %p67, %p68
      %p70 = scmp.ne.s32.totalorder %s59, %s60
      %p71 = scmp.eq.s32.totalorder %s31, 0
      %p72 = por %p70, %p71
      %p73 = scmp.ne.s32.totalorder %s59, %s60
      %p74 = scmp.eq.s32.totalorder %s32, 11
      %p75 = por %p73, %p74
      %p77 = scmp.ne.s32.totalorder %s60, %s76
      %p78 = scmp.eq.s32.totalorder %s32, 0
      %p79 = por %p77, %p78
      %s81 = sadd.s32 %s80, 1
      %p84 = scmp.eq.s32.totalorder %s26, 11
      %p85 = scmp.ne.s32.totalorder %s80, %s82
      %p86 = scmp.eq.s32.totalorder %s26, 0
      %p87 = por %p85, %p86
      %p88 = scmp.ne.s32.totalorder %s80, %s82
      %p89 = scmp.eq.s32.totalorder %s31, 11
      %p90 = por %p88, %p89
      %p91 = scmp.ne.s32.totalorder %s82, %s83
      %p92 = scmp.eq.s32.totalorder %s31, 0
      %p93 = por %p91, %p92
      %p94 = scmp.ne.s32.totalorder %s82, %s83
      %p95 = scmp.eq.s32.totalorder %s32, 11
      %p96 = por %p94, %p95
      %p98 = scmp.ne.s32.totalorder %s83, %s97
      %p99 = scmp.eq.s32.totalorder %s32, 0
      %p100 = por %p98, %p99
      %s101 = ssub.s32 %s33, %s45
      %p102 = scmp.eq.s32.totalorder %s101, 0
      %s104 = sadd.s32 %s103, 1
      %s105 = scalar_select %p102, %s103, %s104
      %p108 = pneg %p102
      %p109 = scmp.eq.s32.totalorder %s26, 11
      %p110 = por %p108, %p109
      %p111 = scmp.ne.s32.totalorder %s103, %s106
      %p112 = scmp.eq.s32.totalorder %s26, 0
      %p113 = por %p111, %p112
      %p114 = scmp.ne.s32.totalorder %s103, %s106
      %p115 = scmp.eq.s32.totalorder %s31, 11
      %p116 = por %p114, %p115
      %p117 = scmp.ne.s32.totalorder %s106, %s107
      %p118 = scmp.eq.s32.totalorder %s31, 0
      %p119 = por %p117, %p118
      %p120 = scmp.ne.s32.totalorder %s106, %s107
      %p121 = scmp.eq.s32.totalorder %s32, 11
      %p122 = por %p120, %p121
      %p124 = scmp.ne.s32.totalorder %s107, %s123
      %p125 = scmp.eq.s32.totalorder %s32, 0
      %p126 = por %p124, %p125
      %s128 = sadd.s32 %s127, 1
      %p131 = scmp.eq.s32.totalorder %s26, 11
      %p132 = scmp.ne.s32.totalorder %s127, %s129
      %p133 = scmp.eq.s32.totalorder %s26, 0
      %p134 = por %p132, %p133
      %p135 = scmp.ne.s32.totalorder %s127, %s129
      %p136 = scmp.eq.s32.totalorder %s31, 11
      %p137 = por %p135, %p136
      %p138 = scmp.ne.s32.totalorder %s129, %s130
      %p139 = scmp.eq.s32.totalorder %s31, 0
      %p140 = por %p138, %p139
      %p141 = scmp.ne.s32.totalorder %s129, %s130
      %p142 = scmp.eq.s32.totalorder %s32, 11
      %p143 = por %p141, %p142
      %p145 = scmp.ne.s32.totalorder %s130, %s144
      %p146 = scmp.eq.s32.totalorder %s32, 0
      %p147 = por %p145, %p146
      %s149 = sadd.s32 %s148, 1
      %p152 = scmp.eq.s32.totalorder %s26, 11
      %p153 = scmp.ne.s32.totalorder %s148, %s150
      %p154 = scmp.eq.s32.totalorder %s26, 0
      %p155 = por %p153, %p154
      %p156 = scmp.ne.s32.totalorder %s148, %s150
      %p157 = scmp.eq.s32.totalorder %s31, 11
      %p158 = por %p156, %p157
      %p159 = scmp.ne.s32.totalorder %s150, %s151
      %p160 = scmp.eq.s32.totalorder %s31, 0
      %p161 = por %p159, %p160
      %p162 = scmp.ne.s32.totalorder %s150, %s151
      %p163 = scmp.eq.s32.totalorder %s32, 11
      %p164 = por %p162, %p163
      %p166 = scmp.ne.s32.totalorder %s151, %s165
      %p167 = scmp.eq.s32.totalorder %s32, 0
      %p168 = por %p166, %p167
      %s169 = ssub.s32 %s33, %s45
      %p170 = scmp.eq.s32.totalorder %s169, 0
      %s172 = sadd.s32 %s171, 1
      %s173 = scalar_select %p170, %s171, %s172
      %p176 = pneg %p170
      %p177 = scmp.eq.s32.totalorder %s26, 11
      %p178 = por %p176, %p177
      %p179 = scmp.ne.s32.totalorder %s171, %s174
      %p180 = scmp.eq.s32.totalorder %s26, 0
      %p181 = por %p179, %p180
      %p182 = scmp.ne.s32.totalorder %s171, %s174
      %p183 = scmp.eq.s32.totalorder %s31, 11
      %p184 = por %p182, %p183
      %p185 = scmp.ne.s32.totalorder %s174, %s175
      %p186 = scmp.eq.s32.totalorder %s31, 0
      %p187 = por %p185, %p186
      %p188 = scmp.ne.s32.totalorder %s174, %s175
      %p189 = scmp.eq.s32.totalorder %s32, 11
      %p190 = por %p188, %p189
      %p192 = scmp.ne.s32.totalorder %s175, %s191
      %p193 = scmp.eq.s32.totalorder %s32, 0
      %p194 = por %p192, %p193
      %p195 = scmp.le.s32.totalorder 1, %s26
      %p196 = scmp.lt.s32.totalorder %s26, 13
      %p197 = pnand %p195, %p196
      %p198 = pneg %p197
      // Predicated region
      $region9: #{tpu_custom_call.1} parent=5 // pred_check
        _
      $region10: #{tpu_custom_call.1} parent=5 // pred_check_branch
        %200 = sbr.rel (%p197) target = $region12
      $region11: #{tpu_custom_call.1} parent=5 // pred_region
        %s201 = ssub.s32 %s26, 1
        // Predicated region
        $region13: #{tpu_custom_call.1} parent=11 // pred_check
          %p202 = pneg %p93
        $region14: #{tpu_custom_call.1} parent=11 // pred_check_branch
          %204 = sbr.rel (%p202) target = $region16
        $region15: #{tpu_custom_call.1} parent=11 // pred_region
          _
        $region16: #{tpu_custom_call.1} parent=11 // pred_fallthru
          _
        // Predicated region
        $region17: #{tpu_custom_call.1} parent=11 // pred_check
          %p205 = pneg %p140
        $region18: #{tpu_custom_call.1} parent=11 // pred_check_branch
          %207 = sbr.rel (%p205) target = $region20
        $region19: #{tpu_custom_call.1} parent=11 // pred_region
          _
        $region20: #{tpu_custom_call.1} parent=11 // pred_fallthru
          _
        // Predicated region
        $region21: #{tpu_custom_call.1} parent=11 // pred_check
          %p208 = pneg %p161
        $region22: #{tpu_custom_call.1} parent=11 // pred_check_branch
          %210 = sbr.rel (%p208) target = $region24
        $region23: #{tpu_custom_call.1} parent=11 // pred_region
          _
        $region24: #{tpu_custom_call.1} parent=11 // pred_fallthru
          _
      $region12: #{tpu_custom_call.1} parent=5 // pred_fallthru
        _
      %p211 = scmp.lt.s32.totalorder %s26, 12
      // Predicated region
      $region25: #{tpu_custom_call.1} parent=5 // pred_check
        %p212 = pneg %p211
      $region26: #{tpu_custom_call.1} parent=5 // pred_check_branch
        %214 = sbr.rel (%p212) target = $region28
      $region27: #{tpu_custom_call.1} parent=5 // pred_region
        // Predicated region
        $region29: #{tpu_custom_call.1} parent=27 // pred_check
          %p215 = pneg %p66
        $region30: #{tpu_custom_call.1} parent=27 // pred_check_branch
          %217 = sbr.rel (%p215) target = $region32
        $region31: #{tpu_custom_call.1} parent=27 // pred_region
          %s218 = sand.u32 %s56, 1
          %s219 = sand.u32 %s56, 1
          %s220 = smul.addr %s219, 32
          %s221 = scalar_lea.vmem [#allocation6], %s220
          %s222 = smul.u32 %s33, 3
          %s223 = sadd.s32 %s222, %s34
          %s224 = sld [smem:[#allocation4 + %s223]]
          %s225 = smul.u32 4, %s33
          %s226 = smul.addr %s225, 4
          %s227 = sadd.s32 %s224, %s226
          %s228 = smul.addr %s227, 8
          %s229 = scalar_lea.vmem %s2, %s228
          // Predicated region
          $region33: #{tpu_custom_call.1} parent=31 // pred_check
            _
          $region34: #{tpu_custom_call.1} parent=31 // pred_check_branch
            %231 = sbr.rel (0) target = $region36
          $region35: #{tpu_custom_call.1} parent=31 // pred_region
            // Predicated region
            $region37: #{tpu_custom_call.1} parent=35 // pred_check
              _
            $region38: #{tpu_custom_call.1} parent=35 // pred_check_branch
              %233 = sbr.rel (0) target = $region40
            $region39: #{tpu_custom_call.1} parent=35 // pred_region
              // Predicated region
              $region52: #{tpu_custom_call.1} parent=39 // pred_check
                _
              $region53: #{tpu_custom_call.1} parent=39 // pred_check_branch
                %255 = sbr.rel (0) target = $region55
              $region54: #{tpu_custom_call.1} parent=39 // pred_region
                loop: start=0, step=1, limit=1
                $region56: #{tpu_custom_call.1} parent=54 // loop_pre_header
                  _
                $region57: #{tpu_custom_call.1} parent=54 // loop_header
                  %s257 = sphi 0, %s261
                  %p258 = scmp.ge.s32.totalorder %s257, 1
                  %s262 = sphi %s229, %s229
                  %s263 = sphi %s221, %s221
                $region58: #{tpu_custom_call.1} parent=54 // loop_header_branch
                  %260 = sbr.rel (%p258) target = $region62
                $region59: #{tpu_custom_call.1} parent=54 // loop_body
                  %v264 = vld [vmem:[%s262] sm:$0xff]
                  %265 = vst [vmem:[%s263] sm:$0xff] %v264
                  %v266 = vld [vmem:[%s262 + $0x20] sm:$0xff]
                  %267 = vst [vmem:[%s263 + $0x8] sm:$0xff] %v266
                  %v268 = vld [vmem:[%s262 + $0x40] sm:$0xff]
                  %269 = vst [vmem:[%s263 + $0x10] sm:$0xff] %v268
                  %v270 = vld [vmem:[%s262 + $0x60] sm:$0xff]
                  %271 = vst [vmem:[%s263 + $0x18] sm:$0xff] %v270
                $region60: #{tpu_custom_call.1} parent=54 // loop_footer
                  %s261 = sadd.s32 1, %s257
                $region61: #{tpu_custom_call.1} parent=54 // loop_footer_branch
                  %256 = sbr.rel target = $region57
                $region62: #{tpu_custom_call.1} parent=54 // loop_exit
                  _
              $region55: #{tpu_custom_call.1} parent=39 // pred_fallthru
                _
              // Predicated region
              $region63: #{tpu_custom_call.1} parent=39 // pred_check
                _
              $region64: #{tpu_custom_call.1} parent=39 // pred_check_branch
                %273 = sbr.rel target = $region66
              $region65: #{tpu_custom_call.1} parent=39 // pred_region
                _
              $region66: #{tpu_custom_call.1} parent=39 // pred_fallthru
                _
            $region40: #{tpu_custom_call.1} parent=35 // pred_fallthru
              _
            // Predicated region
            $region41: #{tpu_custom_call.1} parent=35 // pred_check
              _
            $region42: #{tpu_custom_call.1} parent=35 // pred_check_branch
              %235 = sbr.rel target = $region44
            $region43: #{tpu_custom_call.1} parent=35 // pred_region
              %s237 = ssub.s32 256, 1
              loop: start=0, step=1, limit=1
              $region45: #{tpu_custom_call.1} parent=43 // loop_pre_header
                _
              $region46: #{tpu_custom_call.1} parent=43 // loop_header
                %s239 = sphi 0, %s243
                %p240 = scmp.ge.s32.totalorder %s239, 1
                %s244 = sphi %s229, %s229
                %s245 = sphi %s221, %s221
              $region47: #{tpu_custom_call.1} parent=43 // loop_header_branch
                %242 = sbr.rel (%p240) target = $region51
              $region48: #{tpu_custom_call.1} parent=43 // loop_body
                %v246 = vld [vmem:[%s244] sm:%s237]
                %247 = vst [vmem:[%s245] sm:%s237] %v246
                %v248 = vld [vmem:[%s244 + $0x20] sm:%s237]
                %249 = vst [vmem:[%s245 + $0x8] sm:%s237] %v248
                %v250 = vld [vmem:[%s244 + $0x40] sm:%s237]
                %251 = vst [vmem:[%s245 + $0x10] sm:%s237] %v250
                %v252 = vld [vmem:[%s244 + $0x60] sm:%s237]
                %253 = vst [vmem:[%s245 + $0x18] sm:%s237] %v252
              $region49: #{tpu_custom_call.1} parent=43 // loop_footer
                %s243 = sadd.s32 1, %s239
              $region50: #{tpu_custom_call.1} parent=43 // loop_footer_branch
                %238 = sbr.rel target = $region46
              $region51: #{tpu_custom_call.1} parent=43 // loop_exit
                _
            $region44: #{tpu_custom_call.1} parent=35 // pred_fallthru
              _
          $region36: #{tpu_custom_call.1} parent=31 // pred_fallthru
            _
          %274 = vnop
        $region32: #{tpu_custom_call.1} parent=27 // pred_fallthru
          _
        // Predicated region
        $region67: #{tpu_custom_call.1} parent=27 // pred_check
          %p275 = pneg %p113
        $region68: #{tpu_custom_call.1} parent=27 // pred_check_branch
          %277 = sbr.rel (%p275) target = $region70
        $region69: #{tpu_custom_call.1} parent=27 // pred_region
          %s278 = smul.u32 16, %s33
          %p279 = scmp.lt.s32.totalorder %s278, 63
          %s280 = scalar_select %p279, %s278, 63
          %s281 = smul.addr %s280, 8
          %s282 = scalar_lea.vmem %s4, %s281
          %s283 = smul.u32 16, %s33
        $region70: #{tpu_custom_call.1} parent=27 // pred_fallthru
          _
      $region28: #{tpu_custom_call.1} parent=5 // pred_fallthru
        _
      %p284 = scmp.le.s32.totalorder 1, %s26
      %p285 = scmp.lt.s32.totalorder %s26, 13
      %p286 = pnand %p284, %p285
      %p287 = pneg %p286
      // Predicated region
      $region71: #{tpu_custom_call.1} parent=5 // pred_check
        _
      $region72: #{tpu_custom_call.1} parent=5 // pred_check_branch
        %289 = sbr.rel (%p286) target = $region74
      $region73: #{tpu_custom_call.1} parent=5 // pred_region
        %s290 = ssub.s32 %s26, 1
        %s291 = sand.u32 %s59, 1
        %s292 = sand.u32 %s59, 1
        %s293 = smul.addr %s292, 32
        %s294 = scalar_lea.vmem [#allocation6], %s293
        // Predicated region
        $region75: #{tpu_custom_call.1} parent=73 // pred_check
          %p295 = pneg %p72
        $region76: #{tpu_custom_call.1} parent=73 // pred_check_branch
          %297 = sbr.rel (%p295) target = $region78
        $region77: #{tpu_custom_call.1} parent=73 // pred_region
          _
        $region78: #{tpu_custom_call.1} parent=73 // pred_fallthru
          _
        %s298 = sand.u32 %s59, 1
        %s299 = sand.u32 %s59, 1
        %s300 = smul.addr %s299, 32
        %s301 = scalar_lea.vmem [#allocation6], %s300
        %p302 = pneg %p72
        %p303 = pneg %p69
        %p304 = pneg %p93
        %p305 = pneg %p90
        %s306 = smul.u32 16, %s35
        %p307 = scmp.lt.s32.totalorder %s306, 63
        %s308 = scalar_select %p307, %s306, 63
        %s309 = smul.addr %s308, 8
        %s310 = scalar_lea.vmem %s4, %s309
        %p311 = pneg %p119
        %p312 = pneg %p116
        %p313 = pneg %p140
        %p314 = pneg %p137
        %p315 = pneg %p161
        %p316 = pneg %p158
        %p317 = pneg %p187
        %p318 = pneg %p184
        %s319 = smul.u32 16, %s35
        %p320 = scmp.lt.s32.totalorder %s319, 63
        %s321 = scalar_select %p320, %s319, 63
        %s322 = smul.addr %s321, 4
        %s323 = scalar_lea.vmem %s7, %s322
        %s324 = smul.u32 %s35, 3
        %s325 = sadd.s32 %s324, %s36
        %s326 = sld [smem:[#allocation4 + %s325]]
        %s327 = smul.u32 4, %s35
        %s328 = smul.u32 16, %s35
        %p329 = scmp.lt.s32.totalorder %s328, 63
        %s330 = scalar_select %p329, %s328, 63
        %s331 = smul.addr %s330, 8
        %s332 = scalar_lea.vmem %s4, %s331
        %s333 = smul.u32 16, %s35
        %s334 = smul.u32 16, %s35
        %p335 = scmp.lt.s32.totalorder %s334, 63
        %s336 = scalar_select %p335, %s334, 63
        %s337 = smul.addr %s336, 4
        %s338 = scalar_lea.vmem %s7, %s337
        %s339 = smul.u32 16, %s35
        %p341 = scmp.eq.s32.totalorder %s36, 0
        // Predicated region
        $region79: #{tpu_custom_call.1} parent=73 // pred_check
          %p342 = pneg %p341
        $region80: #{tpu_custom_call.1} parent=73 // pred_check_branch
          %344 = sbr.rel (%p342) target = $region82
        $region81: #{tpu_custom_call.1} parent=73 // pred_region
          %vm345 = vcmask 261120
          %346 = vst.msk [vmem:[#allocation2] sm:$0xff] %vm345, 0.0
          %347 = vst.msk [vmem:[#allocation2 + $0x8] sm:$0xff] %vm345, 0.0
          %348 = vst.msk [vmem:[#allocation2 + $0x10] sm:$0xff] %vm345, 0.0
          %349 = vst.msk [vmem:[#allocation2 + $0x18] sm:$0xff] %vm345, 0.0
          %350 = vst.msk [vmem:[#allocation2 + $0x20] sm:$0xff] %vm345, 0.0
          %351 = vst.msk [vmem:[#allocation2 + $0x28] sm:$0xff] %vm345, 0.0
          %352 = vst.msk [vmem:[#allocation2 + $0x30] sm:$0xff] %vm345, 0.0
          %353 = vst.msk [vmem:[#allocation2 + $0x38] sm:$0xff] %vm345, 0.0
          %354 = vst.msk [vmem:[#allocation2 + $0x40] sm:$0xff] %vm345, 0.0
          %355 = vst.msk [vmem:[#allocation2 + $0x48] sm:$0xff] %vm345, 0.0
          %356 = vst.msk [vmem:[#allocation2 + $0x50] sm:$0xff] %vm345, 0.0
          %357 = vst.msk [vmem:[#allocation2 + $0x58] sm:$0xff] %vm345, 0.0
          %358 = vst.msk [vmem:[#allocation2 + $0x60] sm:$0xff] %vm345, 0.0
          %359 = vst.msk [vmem:[#allocation2 + $0x68] sm:$0xff] %vm345, 0.0
          %360 = vst.msk [vmem:[#allocation2 + $0x70] sm:$0xff] %vm345, 0.0
          %361 = vst.msk [vmem:[#allocation2 + $0x78] sm:$0xff] %vm345, 0.0
        $region82: #{tpu_custom_call.1} parent=73 // pred_fallthru
          _
        %s362 = sld [smem:[#allocation5 + %s35]]
        %p363 = scmp.lt.s32.totalorder %s36, %s362
        // Predicated region
        $region83: #{tpu_custom_call.1} parent=73 // pred_check
          %p364 = pneg %p363
        $region84: #{tpu_custom_call.1} parent=73 // pred_check_branch
          %366 = sbr.rel (%p364) target = $region86
        $region85: #{tpu_custom_call.1} parent=73 // pred_region
          %s367 = smul.u32 %s35, 3
          %s368 = sadd.s32 %s367, %s36
          %s369 = sld [smem:[#allocation4 + %s368]]
          %s370 = smul.u32 %s369, 128
          %v371 = vld [vmem:[%s294] sm:$0xff]
          %v372 = vld [vmem:[%s294 + $0x8] sm:$0xff]
          %v373 = vld [vmem:[%s294 + $0x10] sm:$0xff]
          %v374 = vld [vmem:[%s294 + $0x18] sm:$0xff]
          %v375 = vunpack.c.0.s8 %v371
          %v376 = vunpack.c.1.s8 %v371
          %v377 = vunpack.c.2.s8 %v371
          %v378 = vunpack.c.3.s8 %v371
          %v379 = vunpack.c.0.s8 %v372
          %v380 = vunpack.c.1.s8 %v372
          %v381 = vunpack.c.2.s8 %v372
          %v382 = vunpack.c.3.s8 %v372
          %v383 = vunpack.c.0.s8 %v373
          %v384 = vunpack.c.1.s8 %v373
          %v385 = vunpack.c.2.s8 %v373
          %v386 = vunpack.c.3.s8 %v373
          %v387 = vunpack.c.0.s8 %v374
          %v388 = vunpack.c.1.s8 %v374
          %v389 = vunpack.c.2.s8 %v374
          %v390 = vunpack.c.3.s8 %v374
          %v391 = vcvt.s32.f32 %v375
          %v392 = vcvt.s32.f32 %v376
          %v393 = vcvt.s32.f32 %v377
          %v394 = vcvt.s32.f32 %v378
          %v395 = vcvt.s32.f32 %v379
          %v396 = vcvt.s32.f32 %v380
          %v397 = vcvt.s32.f32 %v381
          %v398 = vcvt.s32.f32 %v382
          %v399 = vcvt.s32.f32 %v383
          %v400 = vcvt.s32.f32 %v384
          %v401 = vcvt.s32.f32 %v385
          %v402 = vcvt.s32.f32 %v386
          %v403 = vcvt.s32.f32 %v387
          %v404 = vcvt.s32.f32 %v388
          %v405 = vcvt.s32.f32 %v389
          %v406 = vcvt.s32.f32 %v390
          %v407 = vpack.c.bf16 %v392, %v391
          %v408 = vpack.c.bf16 %v394, %v393
          %v409 = vpack.c.bf16 %v396, %v395
          %v410 = vpack.c.bf16 %v398, %v397
          %v411 = vpack.c.bf16 %v400, %v399
          %v412 = vpack.c.bf16 %v402, %v401
          %v413 = vpack.c.bf16 %v404, %v403
          %v414 = vpack.c.bf16 %v406, %v405
          %v415 = vld [vmem:[#allocation2] sm:$0xff]
          %v416 = vld [vmem:[#allocation2 + $0x8] sm:$0xff]
          %v417 = vld [vmem:[#allocation2 + $0x10] sm:$0xff]
          %v418 = vld [vmem:[#allocation2 + $0x18] sm:$0xff]
          %v419 = vld [vmem:[#allocation2 + $0x20] sm:$0xff]
          %v420 = vld [vmem:[#allocation2 + $0x28] sm:$0xff]
          %v421 = vld [vmem:[#allocation2 + $0x30] sm:$0xff]
          %v422 = vld [vmem:[#allocation2 + $0x38] sm:$0xff]
          %v423 = vld [vmem:[#allocation2 + $0x40] sm:$0xff]
          %v424 = vld [vmem:[#allocation2 + $0x48] sm:$0xff]
          %v425 = vld [vmem:[#allocation2 + $0x50] sm:$0xff]
          %v426 = vld [vmem:[#allocation2 + $0x58] sm:$0xff]
          %v427 = vld [vmem:[#allocation2 + $0x60] sm:$0xff]
          %v428 = vld [vmem:[#allocation2 + $0x68] sm:$0xff]
          %v429 = vld [vmem:[#allocation2 + $0x70] sm:$0xff]
          %v430 = vld [vmem:[#allocation2 + $0x78] sm:$0xff]
          %s431 = sshra.s32 %s370, 3
          %s432 = sand.u32 %s370, 7
          %s433 = smul.addr %s431, 4
          %s434 = scalar_lea.vmem %s3, %s433
          %v435 = vld [vmem:[%s434] sm:$0xf]
          %v436 = vld [vmem:[%s434 + $0x4] sm:$0xf]
          %v437 = vld [vmem:[%s434 + $0x8] sm:$0xf]
          %v438 = vld [vmem:[%s434 + $0xc] sm:$0xf]
          %v439 = vld [vmem:[%s434 + $0x10] sm:$0xf]
          %v440 = vld [vmem:[%s434 + $0x14] sm:$0xf]
          %v441 = vld [vmem:[%s434 + $0x18] sm:$0xf]
          %v442 = vld [vmem:[%s434 + $0x1c] sm:$0xf]
          %v443 = vld [vmem:[%s434 + $0x20] sm:$0xf]
          %v444 = vld [vmem:[%s434 + $0x24] sm:$0xf]
          %v445 = vld [vmem:[%s434 + $0x28] sm:$0xf]
          %v446 = vld [vmem:[%s434 + $0x2c] sm:$0xf]
          %v447 = vld [vmem:[%s434 + $0x30] sm:$0xf]
          %v448 = vld [vmem:[%s434 + $0x34] sm:$0xf]
          %v449 = vld [vmem:[%s434 + $0x38] sm:$0xf]
          %v450 = vld [vmem:[%s434 + $0x3c] sm:$0xf]
          %v467 = vunpack.c.l.b16 %v435
          %v468 = vunpack.c.l.b16 %v436
          %v469 = vunpack.c.l.b16 %v437
          %v470 = vunpack.c.l.b16 %v438
          %v471 = vunpack.c.l.b16 %v439
          %v472 = vunpack.c.l.b16 %v440
          %v473 = vunpack.c.l.b16 %v441
          %v474 = vunpack.c.l.b16 %v442
          %v475 = vunpack.c.l.b16 %v443
          %v476 = vunpack.c.l.b16 %v444
          %v477 = vunpack.c.l.b16 %v445
          %v478 = vunpack.c.l.b16 %v446
          %v479 = vunpack.c.l.b16 %v447
          %v480 = vunpack.c.l.b16 %v448
          %v481 = vunpack.c.l.b16 %v449
          %v482 = vunpack.c.l.b16 %v450
          %v483 = vpack.c.b16 %v468, %v467
          %v484 = vpack.c.b16 %v470, %v469
          %v485 = vpack.c.b16 %v472, %v471
          %v486 = vpack.c.b16 %v474, %v473
          %v487 = vpack.c.b16 %v476, %v475
          %v488 = vpack.c.b16 %v478, %v477
          %v489 = vpack.c.b16 %v480, %v479
          %v490 = vpack.c.b16 %v482, %v481
          %499 = vmatpush.bf16.msra.mxu0 %v490
          %500 = vmatpush.bf16.msra.mxu0 %v489
          %501 = vmatpush.bf16.msra.mxu0 %v488
          %502 = vmatpush.bf16.msra.mxu0 %v487
          %503 = vmatpush.bf16.msra.mxu0 %v486
          %504 = vmatpush.bf16.msra.mxu0 %v485
          %505 = vmatpush.bf16.msra.mxu0 %v484
          %506 = vmatpush.bf16.msra.mxu0 %v483
          %507 = vmatmul.bf16.gmra.mxu0 %v407
          %v508 = vpop.f32.mrf.mxu0
          %v509 = vadd.f32 0.0, %v508
          %v510 = vpop.f32.mrf.mxu0
          %v511 = vadd.f32 0.0, %v510
          %512 = vmatmul.bf16.gmra.mxu0 %v408
          %v513 = vpop.f32.mrf.mxu0
          %v514 = vadd.f32 0.0, %v513
          %v515 = vpop.f32.mrf.mxu0
          %v516 = vadd.f32 0.0, %v515
          %517 = vmatmul.bf16.gmra.mxu0 %v409
          %v518 = vpop.f32.mrf.mxu0
          %v519 = vadd.f32 0.0, %v518
          %v520 = vpop.f32.mrf.mxu0
          %v521 = vadd.f32 0.0, %v520
          %522 = vmatmul.bf16.gmra.mxu0 %v410
          %v523 = vpop.f32.mrf.mxu0
          %v524 = vadd.f32 0.0, %v523
          %v525 = vpop.f32.mrf.mxu0
          %v526 = vadd.f32 0.0, %v525
          %527 = vmatmul.bf16.gmra.mxu0 %v411
          %v528 = vpop.f32.mrf.mxu0
          %v529 = vadd.f32 0.0, %v528
          %v530 = vpop.f32.mrf.mxu0
          %v531 = vadd.f32 0.0, %v530
          %532 = vmatmul.bf16.gmra.mxu0 %v412
          %v533 = vpop.f32.mrf.mxu0
          %v534 = vadd.f32 0.0, %v533
          %v535 = vpop.f32.mrf.mxu0
          %v536 = vadd.f32 0.0, %v535
          %537 = vmatmul.bf16.gmra.mxu0 %v413
          %v538 = vpop.f32.mrf.mxu0
          %v539 = vadd.f32 0.0, %v538
          %v540 = vpop.f32.mrf.mxu0
          %v541 = vadd.f32 0.0, %v540
          %542 = vmatmul.bf16.gmra.mxu0 %v414
          %v543 = vpop.f32.mrf.mxu0
          %v544 = vadd.f32 0.0, %v543
          %v545 = vpop.f32.mrf.mxu0
          %v546 = vadd.f32 0.0, %v545
          %547 = vdwg.mxu0
          %v548 = vadd.f32 %v415, %v509
          %v549 = vadd.f32 %v416, %v511
          %v550 = vadd.f32 %v417, %v514
          %v551 = vadd.f32 %v418, %v516
          %v552 = vadd.f32 %v419, %v519
          %v553 = vadd.f32 %v420, %v521
          %v554 = vadd.f32 %v421, %v524
          %v555 = vadd.f32 %v422, %v526
          %v556 = vadd.f32 %v423, %v529
          %v557 = vadd.f32 %v424, %v531
          %v558 = vadd.f32 %v425, %v534
          %v559 = vadd.f32 %v426, %v536
          %v560 = vadd.f32 %v427, %v539
          %v561 = vadd.f32 %v428, %v541
          %v562 = vadd.f32 %v429, %v544
          %v563 = vadd.f32 %v430, %v546
          %vm564 = vcmask 261120
          %565 = vst.msk [vmem:[#allocation2] sm:$0xff] %vm564, %v548
          %566 = vst.msk [vmem:[#allocation2 + $0x8] sm:$0xff] %vm564, %v549
          %567 = vst.msk [vmem:[#allocation2 + $0x10] sm:$0xff] %vm564, %v550
          %568 = vst.msk [vmem:[#allocation2 + $0x18] sm:$0xff] %vm564, %v551
          %569 = vst.msk [vmem:[#allocation2 + $0x20] sm:$0xff] %vm564, %v552
          %570 = vst.msk [vmem:[#allocation2 + $0x28] sm:$0xff] %vm564, %v553
          %571 = vst.msk [vmem:[#allocation2 + $0x30] sm:$0xff] %vm564, %v554
          %572 = vst.msk [vmem:[#allocation2 + $0x38] sm:$0xff] %vm564, %v555
          %573 = vst.msk [vmem:[#allocation2 + $0x40] sm:$0xff] %vm564, %v556
          %574 = vst.msk [vmem:[#allocation2 + $0x48] sm:$0xff] %vm564, %v557
          %575 = vst.msk [vmem:[#allocation2 + $0x50] sm:$0xff] %vm564, %v558
          %576 = vst.msk [vmem:[#allocation2 + $0x58] sm:$0xff] %vm564, %v559
          %577 = vst.msk [vmem:[#allocation2 + $0x60] sm:$0xff] %vm564, %v560
          %578 = vst.msk [vmem:[#allocation2 + $0x68] sm:$0xff] %vm564, %v561
          %579 = vst.msk [vmem:[#allocation2 + $0x70] sm:$0xff] %vm564, %v562
          %580 = vst.msk [vmem:[#allocation2 + $0x78] sm:$0xff] %vm564, %v563
        $region86: #{tpu_custom_call.1} parent=73 // pred_fallthru
          _
        %p581 = scmp.eq.s32.totalorder %s36, 2
        // Predicated region
        $region87: #{tpu_custom_call.1} parent=73 // pred_check
          %p582 = pneg %p581
        $region88: #{tpu_custom_call.1} parent=73 // pred_check_branch
          %584 = sbr.rel (%p582) target = $region90
        $region89: #{tpu_custom_call.1} parent=73 // pred_region
          %v585 = vld [vmem:[%s332] sm:$0xff]
          %v586 = vld [vmem:[%s332 + $0x8] sm:$0xff]
          %v587 = vld [vmem:[%s332 + $0x10] sm:$0xff]
          %v588 = vld [vmem:[%s332 + $0x18] sm:$0xff]
          %v589 = vld [vmem:[%s332 + $0x20] sm:$0xff]
          %v590 = vld [vmem:[%s332 + $0x28] sm:$0xff]
          %v591 = vld [vmem:[%s332 + $0x30] sm:$0xff]
          %v592 = vld [vmem:[%s332 + $0x38] sm:$0xff]
          %v593 = vld [vmem:[%s332 + $0x40] sm:$0xff]
          %v594 = vld [vmem:[%s332 + $0x48] sm:$0xff]
          %v595 = vld [vmem:[%s332 + $0x50] sm:$0xff]
          %v596 = vld [vmem:[%s332 + $0x58] sm:$0xff]
          %v597 = vld [vmem:[%s332 + $0x60] sm:$0xff]
          %v598 = vld [vmem:[%s332 + $0x68] sm:$0xff]
          %v599 = vld [vmem:[%s332 + $0x70] sm:$0xff]
          %v600 = vld [vmem:[%s332 + $0x78] sm:$0xff]
          %v601 = vld [vmem:[#allocation2] sm:$0xff]
          %v602 = vld [vmem:[#allocation2 + $0x8] sm:$0xff]
          %v603 = vld [vmem:[#allocation2 + $0x10] sm:$0xff]
          %v604 = vld [vmem:[#allocation2 + $0x18] sm:$0xff]
          %v605 = vld [vmem:[#allocation2 + $0x20] sm:$0xff]
          %v606 = vld [vmem:[#allocation2 + $0x28] sm:$0xff]
          %v607 = vld [vmem:[#allocation2 + $0x30] sm:$0xff]
          %v608 = vld [vmem:[#allocation2 + $0x38] sm:$0xff]
          %v609 = vld [vmem:[#allocation2 + $0x40] sm:$0xff]
          %v610 = vld [vmem:[#allocation2 + $0x48] sm:$0xff]
          %v611 = vld [vmem:[#allocation2 + $0x50] sm:$0xff]
          %v612 = vld [vmem:[#allocation2 + $0x58] sm:$0xff]
          %v613 = vld [vmem:[#allocation2 + $0x60] sm:$0xff]
          %v614 = vld [vmem:[#allocation2 + $0x68] sm:$0xff]
          %v615 = vld [vmem:[#allocation2 + $0x70] sm:$0xff]
          %v616 = vld [vmem:[#allocation2 + $0x78] sm:$0xff]
          %618 = vset.pattern.permute.xlu0 0
          %619 = vperm.xlu0 %618, %v585
          %v620 = vpop.permute.xlu0 %619
          %623 = vset.pattern.permute.xlu0 0
          %624 = vperm.xlu0 %623, %v586
          %v625 = vpop.permute.xlu0 %624
          %628 = vset.pattern.permute.xlu0 0
          %629 = vperm.xlu0 %628, %v587
          %v630 = vpop.permute.xlu0 %629
          %633 = vset.pattern.permute.xlu0 0
          %634 = vperm.xlu0 %633, %v588
          %v635 = vpop.permute.xlu0 %634
          %638 = vset.pattern.permute.xlu0 0
          %639 = vperm.xlu0 %638, %v589
          %v640 = vpop.permute.xlu0 %639
          %643 = vset.pattern.permute.xlu0 0
          %644 = vperm.xlu0 %643, %v590
          %v645 = vpop.permute.xlu0 %644
          %648 = vset.pattern.permute.xlu0 0
          %649 = vperm.xlu0 %648, %v591
          %v650 = vpop.permute.xlu0 %649
          %653 = vset.pattern.permute.xlu0 0
          %654 = vperm.xlu0 %653, %v592
          %v655 = vpop.permute.xlu0 %654
          %658 = vset.pattern.permute.xlu0 0
          %659 = vperm.xlu0 %658, %v593
          %v660 = vpop.permute.xlu0 %659
          %663 = vset.pattern.permute.xlu0 0
          %664 = vperm.xlu0 %663, %v594
          %v665 = vpop.permute.xlu0 %664
          %668 = vset.pattern.permute.xlu0 0
          %669 = vperm.xlu0 %668, %v595
          %v670 = vpop.permute.xlu0 %669
          %673 = vset.pattern.permute.xlu0 0
          %674 = vperm.xlu0 %673, %v596
          %v675 = vpop.permute.xlu0 %674
          %678 = vset.pattern.permute.xlu0 0
          %679 = vperm.xlu0 %678, %v597
          %v680 = vpop.permute.xlu0 %679
          %683 = vset.pattern.permute.xlu0 0
          %684 = vperm.xlu0 %683, %v598
          %v685 = vpop.permute.xlu0 %684
          %688 = vset.pattern.permute.xlu0 0
          %689 = vperm.xlu0 %688, %v599
          %v690 = vpop.permute.xlu0 %689
          %693 = vset.pattern.permute.xlu0 0
          %694 = vperm.xlu0 %693, %v600
          %v695 = vpop.permute.xlu0 %694
          %v697 = vmul.f32 %v620, %v601
          %v698 = vmul.f32 %v625, %v602
          %v699 = vmul.f32 %v630, %v603
          %v700 = vmul.f32 %v635, %v604
          %v701 = vmul.f32 %v640, %v605
          %v702 = vmul.f32 %v645, %v606
          %v703 = vmul.f32 %v650, %v607
          %v704 = vmul.f32 %v655, %v608
          %v705 = vmul.f32 %v660, %v609
          %v706 = vmul.f32 %v665, %v610
          %v707 = vmul.f32 %v670, %v611
          %v708 = vmul.f32 %v675, %v612
          %v709 = vmul.f32 %v680, %v613
          %v710 = vmul.f32 %v685, %v614
          %v711 = vmul.f32 %v690, %v615
          %v712 = vmul.f32 %v695, %v616
          %v713 = vld [vmem:[%s5] sm:$0x1]
          %v715 = vperm.slane %v713, 0
          %v717 = vadd.f32 %v697, %v715
          %v718 = vadd.f32 %v698, %v715
          %v719 = vadd.f32 %v699, %v715
          %v720 = vadd.f32 %v700, %v715
          %v721 = vadd.f32 %v701, %v715
          %v722 = vadd.f32 %v702, %v715
          %v723 = vadd.f32 %v703, %v715
          %v724 = vadd.f32 %v704, %v715
          %v725 = vadd.f32 %v705, %v715
          %v726 = vadd.f32 %v706, %v715
          %v727 = vadd.f32 %v707, %v715
          %v728 = vadd.f32 %v708, %v715
          %v729 = vadd.f32 %v709, %v715
          %v730 = vadd.f32 %v710, %v715
          %v731 = vadd.f32 %v711, %v715
          %v732 = vadd.f32 %v712, %v715
          %v733 = vmax.f32 %v717, 0.0
          %v734 = vmax.f32 %v718, 0.0
          %v735 = vmax.f32 %v719, 0.0
          %v736 = vmax.f32 %v720, 0.0
          %v737 = vmax.f32 %v721, 0.0
          %v738 = vmax.f32 %v722, 0.0
          %v739 = vmax.f32 %v723, 0.0
          %v740 = vmax.f32 %v724, 0.0
          %v741 = vmax.f32 %v725, 0.0
          %v742 = vmax.f32 %v726, 0.0
          %v743 = vmax.f32 %v727, 0.0
          %v744 = vmax.f32 %v728, 0.0
          %v745 = vmax.f32 %v729, 0.0
          %v746 = vmax.f32 %v730, 0.0
          %v747 = vmax.f32 %v731, 0.0
          %v748 = vmax.f32 %v732, 0.0
          %v749 = vpack.c.bf16 %v734, %v733
          %v750 = vpack.c.bf16 %v736, %v735
          %v751 = vpack.c.bf16 %v738, %v737
          %v752 = vpack.c.bf16 %v740, %v739
          %v753 = vpack.c.bf16 %v742, %v741
          %v754 = vpack.c.bf16 %v744, %v743
          %v755 = vpack.c.bf16 %v746, %v745
          %v756 = vpack.c.bf16 %v748, %v747
          %v757 = vld [vmem:[%s6] sm:$0xf]
          %v758 = vld [vmem:[%s6 + $0x4] sm:$0xf]
          %v759 = vld [vmem:[%s6 + $0x8] sm:$0xf]
          %v760 = vld [vmem:[%s6 + $0xc] sm:$0xf]
          %v765 = vunpack.c.l.b16 %v757
          %v766 = vunpack.c.l.b16 %v758
          %v767 = vunpack.c.l.b16 %v759
          %v768 = vunpack.c.l.b16 %v760
          %v769 = vpack.c.b16 %v766, %v765
          %v770 = vpack.c.b16 %v768, %v767
          %vm773 = vcmask 261120
          %v775 = vsel %vm773, %v749, 0
          %v778 = vsel %vm773, %v750, 0
          %v781 = vsel %vm773, %v751, 0
          %v784 = vsel %vm773, %v752, 0
          %v787 = vsel %vm773, %v753, 0
          %v790 = vsel %vm773, %v754, 0
          %v793 = vsel %vm773, %v755, 0
          %v796 = vsel %vm773, %v756, 0
          %798 = vmatpush.bf16.msra.mxu0 0
          %799 = vmatpush.bf16.msra.mxu0 0
          %800 = vmatpush.bf16.msra.mxu0 0
          %801 = vmatpush.bf16.msra.mxu0 0
          %802 = vmatpush.bf16.msra.mxu0 0
          %803 = vmatpush.bf16.msra.mxu0 0
          %804 = vmatpush.bf16.msra.mxu0 %v770
          %805 = vmatpush.bf16.msra.mxu0 %v769
          %806 = vmatmul.bf16.gmra.mxu0 %v775
          %v807 = vpop.f32.mrf.mxu0
          %v808 = vadd.f32 0.0, %v807
          %v809 = vpop.f32.mrf.mxu0
          %v810 = vadd.f32 0.0, %v809
          %811 = vmatmul.bf16.gmra.mxu0 %v778
          %v812 = vpop.f32.mrf.mxu0
          %v813 = vadd.f32 0.0, %v812
          %v814 = vpop.f32.mrf.mxu0
          %v815 = vadd.f32 0.0, %v814
          %816 = vmatmul.bf16.gmra.mxu0 %v781
          %v817 = vpop.f32.mrf.mxu0
          %v818 = vadd.f32 0.0, %v817
          %v819 = vpop.f32.mrf.mxu0
          %v820 = vadd.f32 0.0, %v819
          %821 = vmatmul.bf16.gmra.mxu0 %v784
          %v822 = vpop.f32.mrf.mxu0
          %v823 = vadd.f32 0.0, %v822
          %v824 = vpop.f32.mrf.mxu0
          %v825 = vadd.f32 0.0, %v824
          %826 = vmatmul.bf16.gmra.mxu0 %v787
          %v827 = vpop.f32.mrf.mxu0
          %v828 = vadd.f32 0.0, %v827
          %v829 = vpop.f32.mrf.mxu0
          %v830 = vadd.f32 0.0, %v829
          %831 = vmatmul.bf16.gmra.mxu0 %v790
          %v832 = vpop.f32.mrf.mxu0
          %v833 = vadd.f32 0.0, %v832
          %v834 = vpop.f32.mrf.mxu0
          %v835 = vadd.f32 0.0, %v834
          %836 = vmatmul.bf16.gmra.mxu0 %v793
          %v837 = vpop.f32.mrf.mxu0
          %v838 = vadd.f32 0.0, %v837
          %v839 = vpop.f32.mrf.mxu0
          %v840 = vadd.f32 0.0, %v839
          %841 = vmatmul.bf16.gmra.mxu0 %v796
          %v842 = vpop.f32.mrf.mxu0
          %v843 = vadd.f32 0.0, %v842
          %v844 = vpop.f32.mrf.mxu0
          %v845 = vadd.f32 0.0, %v844
          %846 = vdwg.mxu0
          %v847 = vmul.f32 %v620, %v808
          %v848 = vmul.f32 %v625, %v810
          %v849 = vmul.f32 %v630, %v813
          %v850 = vmul.f32 %v635, %v815
          %v851 = vmul.f32 %v640, %v818
          %v852 = vmul.f32 %v645, %v820
          %v853 = vmul.f32 %v650, %v823
          %v854 = vmul.f32 %v655, %v825
          %v855 = vmul.f32 %v660, %v828
          %v856 = vmul.f32 %v665, %v830
          %v857 = vmul.f32 %v670, %v833
          %v858 = vmul.f32 %v675, %v835
          %v859 = vmul.f32 %v680, %v838
          %v860 = vmul.f32 %v685, %v840
          %v861 = vmul.f32 %v690, %v843
          %v862 = vmul.f32 %v695, %v845
          %v863 = vpack.c.bf16 %v847, %v847
          %v864 = vpack.c.bf16 %v848, %v848
          %v865 = vpack.c.bf16 %v849, %v849
          %v866 = vpack.c.bf16 %v850, %v850
          %v867 = vpack.c.bf16 %v851, %v851
          %v868 = vpack.c.bf16 %v852, %v852
          %v869 = vpack.c.bf16 %v853, %v853
          %v870 = vpack.c.bf16 %v854, %v854
          %v871 = vpack.c.bf16 %v855, %v855
          %v872 = vpack.c.bf16 %v856, %v856
          %v873 = vpack.c.bf16 %v857, %v857
          %v874 = vpack.c.bf16 %v858, %v858
          %v875 = vpack.c.bf16 %v859, %v859
          %v876 = vpack.c.bf16 %v860, %v860
          %v877 = vpack.c.bf16 %v861, %v861
          %v878 = vpack.c.bf16 %v862, %v862
          %vm879 = vcmask 257024
          %880 = vst.msk [vmem:[%s338] sm:$0xf] %vm879, %v863
          %881 = vst.msk [vmem:[%s338 + $0x4] sm:$0xf] %vm879, %v864
          %882 = vst.msk [vmem:[%s338 + $0x8] sm:$0xf] %vm879, %v865
          %883 = vst.msk [vmem:[%s338 + $0xc] sm:$0xf] %vm879, %v866
          %884 = vst.msk [vmem:[%s338 + $0x10] sm:$0xf] %vm879, %v867
          %885 = vst.msk [vmem:[%s338 + $0x14] sm:$0xf] %vm879, %v868
          %886 = vst.msk [vmem:[%s338 + $0x18] sm:$0xf] %vm879, %v869
          %887 = vst.msk [vmem:[%s338 + $0x1c] sm:$0xf] %vm879, %v870
          %888 = vst.msk [vmem:[%s338 + $0x20] sm:$0xf] %vm879, %v871
          %889 = vst.msk [vmem:[%s338 + $0x24] sm:$0xf] %vm879, %v872
          %890 = vst.msk [vmem:[%s338 + $0x28] sm:$0xf] %vm879, %v873
          %891 = vst.msk [vmem:[%s338 + $0x2c] sm:$0xf] %vm879, %v874
          %892 = vst.msk [vmem:[%s338 + $0x30] sm:$0xf] %vm879, %v875
          %893 = vst.msk [vmem:[%s338 + $0x34] sm:$0xf] %vm879, %v876
          %894 = vst.msk [vmem:[%s338 + $0x38] sm:$0xf] %vm879, %v877
          %895 = vst.msk [vmem:[%s338 + $0x3c] sm:$0xf] %vm879, %v878
        $region90: #{tpu_custom_call.1} parent=73 // pred_fallthru
          _
        %s896 = smul.u32 16, %s35
        %p897 = scmp.lt.s32.totalorder %s896, 63
        %s898 = scalar_select %p897, %s896, 63
        %s899 = smul.addr %s898, 4
        %s900 = scalar_lea.vmem %s7, %s899
        // Predicated region
        $region91: #{tpu_custom_call.1} parent=73 // pred_check
          %p901 = pneg %p184
        $region92: #{tpu_custom_call.1} parent=73 // pred_check_branch
          %903 = sbr.rel (%p901) target = $region94
        $region93: #{tpu_custom_call.1} parent=73 // pred_region
          %s904 = smul.u32 16, %s35
        $region94: #{tpu_custom_call.1} parent=73 // pred_fallthru
          _
      $region74: #{tpu_custom_call.1} parent=5 // pred_fallthru
        _
      %p905 = scmp.le.s32.totalorder 2, %s26
      // Predicated region
      $region95: #{tpu_custom_call.1} parent=5 // pred_check
        %p906 = pneg %p905
      $region96: #{tpu_custom_call.1} parent=5 // pred_check_branch
        %908 = sbr.rel (%p906) target = $region98
      $region97: #{tpu_custom_call.1} parent=5 // pred_region
        %s909 = ssub.s32 %s26, 2
        // Predicated region
        $region99: #{tpu_custom_call.1} parent=97 // pred_check
          %p910 = pneg %p190
        $region100: #{tpu_custom_call.1} parent=97 // pred_check_branch
          %912 = sbr.rel (%p910) target = $region102
        $region101: #{tpu_custom_call.1} parent=97 // pred_region
          %s913 = smul.u32 16, %s37
          %p914 = scmp.lt.s32.totalorder %s913, 63
          %s915 = scalar_select %p914, %s913, 63
          %s916 = smul.addr %s915, 4
          %s917 = scalar_lea.vmem %s7, %s916
        $region102: #{tpu_custom_call.1} parent=97 // pred_fallthru
          _
      $region98: #{tpu_custom_call.1} parent=5 // pred_fallthru
        _
    $region6: #{tpu_custom_call.1} parent=1 // loop_footer
      %s30 = sadd.s32 1, %s26
    $region7: #{tpu_custom_call.1} parent=1 // loop_footer_branch
      %25 = sbr.rel target = $region3
    $region8: #{tpu_custom_call.1} parent=1 // loop_exit
      _

</llo_original>
